<compile_context>
chip_gen: v7x
topology: tpu7x:2x2x1
jax: 0.10.0
libtpu: 0.0.40
codegen_flags: <defaults>
</compile_context>

<pallas_src>
import functools

import jax
import jax.numpy as jnp
from jax import lax
from jax.experimental import pallas as pl
from jax.experimental.pallas import tpu as pltpu

LN_EPS = 1e-5
_HAS_BUFFERED = hasattr(pl, "Buffered")


def _round_up(x: int, m: int) -> int:
    return ((x + m - 1) // m) * m


def _const_spec(shape):
    """BlockSpec for a grid-invariant operand (same block every grid step).

    Single-buffered when supported: the block is DMA'd exactly once, so the
    default second pipeline buffer is pure VMEM waste.
    """
    index_map = lambda i: (0,) * len(shape)
    if _HAS_BUFFERED:
        try:
            return pl.BlockSpec(shape, index_map, pipeline_mode=pl.Buffered(1))
        except TypeError:  # older JAX without pipeline_mode kwarg
            pass
    return pl.BlockSpec(shape, index_map)


def _fused_mlp_kernel(x_ref, w0_ref, b0_ref, *rest, num_rest: int, d_valid: int):
    """One row-tile: [Linear -> LayerNorm -> ReLU] x num_layers, fully fused.

    x_ref:   (tm, d_in_pad)             compute dtype (bf16 or f32)
    w0_ref:  (d_in_pad, d_pad)          compute dtype
    b0_ref:  (1, d_pad)                 f32
    wr_ref:  (num_rest, d_pad, d_pad)   compute dtype   [only when num_rest > 0]
    br_ref:  (num_rest, 1, d_pad)       f32             [only when num_rest > 0]
    g_ref, beta_ref: (1, d_pad)         f32  (shared LayerNorm, PyTorch quirk)
    o_ref:   (tm, d_pad)                out dtype
    """
    if num_rest > 0:
        wr_ref, br_ref, g_ref, beta_ref, o_ref = rest
    else:
        wr_ref = br_ref = None
        g_ref, beta_ref, o_ref = rest

    d_pad = o_ref.shape[-1]
    inv_d = 1.0 / float(d_valid)
    pad_cols = d_pad - d_valid
    act_dtype = x_ref.dtype  # inter-layer activations stay in compute dtype

    # Hoisted once per kernel body (broadcasts are not CSE'd by JAX).
    gamma = g_ref[...]
    beta = beta_ref[...]

    def ln_relu(y):
        # Padded feature columns of `y` are exactly 0 (W / b are zero-padded),
        # so the mean over the valid width is just sum * 1/d_valid.  After
        # centering, padded columns equal -mean; subtract their contribution
        # from the variance with a scalar per-row correction instead of
        # materializing lane-wide masks/selects.
        mean = jnp.sum(y, axis=-1, keepdims=True) * inv_d
        c = y - mean
        var = jnp.sum(c * c, axis=-1, keepdims=True) * inv_d
        if pad_cols:
            var = var - (float(pad_cols) * inv_d) * (mean * mean)
        # gamma/beta are zero in padded columns -> padded outputs stay exactly 0,
        # so they never pollute the next layer's matmul.
        y_hat = c * lax.rsqrt(var + LN_EPS) * gamma + beta
        return jnp.maximum(y_hat, 0.0).astype(act_dtype)

    # Layer 0 (MXU matmul in compute dtype, f32 accumulation).
    h = ln_relu(jnp.dot(x_ref[...], w0_ref[...],
                        preferred_element_type=jnp.float32) + b0_ref[...])

    # Remaining layers: activation stays resident on-chip (no HBM round-trip).
    for l in range(num_rest):  # static unroll; num_layers is small
        y = jnp.dot(h, wr_ref[l], preferred_element_type=jnp.float32)
        h = ln_relu(y + br_ref[l])

    o_ref[...] = h.astype(o_ref.dtype)


class PreProcessorPallas:
    """JAX/Pallas port of PreProcessor (eval mode; Dropout == identity)."""

    def __init__(self, in_channels, hidden_channels, num_layers=2, *,
                 key=None, compute_dtype=jnp.bfloat16, out_dtype=None, tm=512):
        assert num_layers >= 1
        if key is None:
            key = jax.random.PRNGKey(0)
        self.d_in = in_channels
        self.hid = hidden_channels
        self.num_layers = num_layers
        self.compute_dtype = compute_dtype
        self.out_dtype = compute_dtype if out_dtype is None else out_dtype
        self.tm_max = tm

        # Pad feature dims to lane-dense multiples of 128 (zeros -> exact math;
        # LN uses a scalar variance correction over the valid width).
        self.d_in_pad = _round_up(in_channels, 128)
        self.hid_pad = _round_up(hidden_channels, 128)

        def init_linear(k, fan_in, d_out):
            kw, kb = jax.random.split(k)
            s = 1.0 / float(fan_in) ** 0.5
            w = jax.random.uniform(kw, (fan_in, d_out), jnp.float32, -s, s)
            b = jax.random.uniform(kb, (d_out,), jnp.float32, -s, s)
            return w, b

        key, k0 = jax.random.split(key)
        w0, b0 = init_linear(k0, in_channels, hidden_channels)
        self.w0 = (jnp.zeros((self.d_in_pad, self.hid_pad), compute_dtype)
                   .at[:in_channels, :hidden_channels].set(w0.astype(compute_dtype)))
        self.b0 = (jnp.zeros((1, self.hid_pad), jnp.float32)
                   .at[0, :hidden_channels].set(b0))

        if num_layers > 1:
            wr = jnp.zeros((num_layers - 1, self.hid_pad, self.hid_pad), compute_dtype)
            br = jnp.zeros((num_layers - 1, 1, self.hid_pad), jnp.float32)
            for l in range(num_layers - 1):
                key, kl = jax.random.split(key)
                w, b = init_linear(kl, hidden_channels, hidden_channels)
                wr = wr.at[l, :hidden_channels, :hidden_channels].set(
                    w.astype(compute_dtype))
                br = br.at[l, 0, :hidden_channels].set(b)
            self.wr, self.br = wr, br
        else:
            self.wr = self.br = None  # no dummy slab when num_layers == 1

        # Single shared LayerNorm (same module instance reused in PyTorch code).
        self.gamma = (jnp.zeros((1, self.hid_pad), jnp.float32)
                      .at[0, :hidden_channels].set(1.0))
        self.beta = jnp.zeros((1, self.hid_pad), jnp.float32)
        # TODO(synk): training-mode Dropout (stochastic masking via
        # pltpu.prng_random_bits) not implemented; eval-mode forward is exact.

    # ------------------------------------------------------------------ utils
    def _vmem_limit(self):
        """Generation-aware VMEM limit with ~25% headroom for compiler scratch."""
        try:
            cap = pltpu.get_tpu_info().vmem_capacity_bytes
            return int(cap * 3 // 4)
        except Exception:
            return 64 * 1024 * 1024

    def _choose_tm(self, n, vmem_limit):
        comp = jnp.dtype(self.compute_dtype).itemsize
        outb = jnp.dtype(self.out_dtype).itemsize
        sub = 8 if comp >= 4 else 16          # sublane granularity per dtype
        w_buf = 1 if _HAS_BUFFERED else 2
        w_bytes = w_buf * ((self.d_in_pad + (self.num_layers - 1) * self.hid_pad)
                           * self.hid_pad * comp
                           + (2 * self.num_layers + 2) * self.hid_pad * 4)

        # Cap at ceil(N/2) so there are >= 2 grid steps (v7x megacore split).
        tm = min(self.tm_max, _round_up(max(-(-n // 2), sub), sub))
        if tm >= 128:
            tm = (tm // 128) * 128            # full-MXU row tiles for large N

        per_row = (2 * self.d_in_pad * comp           # x (double-buffered)
                   + 2 * self.hid_pad * outb          # out (double-buffered)
                   + self.hid_pad * (4 + comp) * 2)   # f32 matmul result + act
        # TODO(synk): if resident weights alone exceed the budget (hid ~>2-4K on
        # v7x), switch to K-axis grid tiling with an f32 scratch accumulator
        # instead of only shrinking tm.
        while tm > sub and w_bytes + tm * per_row > int(vmem_limit * 0.8):
            tm = max(sub, (tm // 2 // sub) * sub)
        return tm

    # --------------------------------------------------------------- forward
    def __call__(self, x):
        n, d_in = x.shape
        assert d_in == self.d_in

        vmem_limit = self._vmem_limit()
        tm = self._choose_tm(n, vmem_limit)
        n_pad = _round_up(n, tm)

        x_p = jnp.pad(x.astype(self.compute_dtype),
                      ((0, n_pad - n), (0, self.d_in_pad - d_in)))

        num_rest = self.num_layers - 1
        kernel = functools.partial(_fused_mlp_kernel,
                                   num_rest=num_rest, d_valid=self.hid)

        in_specs = [
            pl.BlockSpec((tm, self.d_in_pad), lambda i: (i, 0)),   # x rows
            _const_spec((self.d_in_pad, self.hid_pad)),            # W0
            _const_spec((1, self.hid_pad)),                        # b0
        ]
        args = [x_p, self.w0, self.b0]
        if num_rest > 0:
            in_specs += [_const_spec((num_rest, self.hid_pad, self.hid_pad)),  # W[1:]
                         _const_spec((num_rest, 1, self.hid_pad))]             # b[1:]
            args += [self.wr, self.br]
        in_specs += [_const_spec((1, self.hid_pad)),               # gamma
                     _const_spec((1, self.hid_pad))]               # beta
        args += [self.gamma, self.beta]

        out = pl.pallas_call(
            kernel,
            out_shape=jax.ShapeDtypeStruct((n_pad, self.hid_pad), self.out_dtype),
            grid=(n_pad // tm,),
            in_specs=in_specs,
            out_specs=pl.BlockSpec((tm, self.hid_pad), lambda i: (i, 0)),
            compiler_params=pltpu.CompilerParams(
                dimension_semantics=("parallel",),   # megacore split on v7x
                vmem_limit_bytes=vmem_limit,
            ),
        )(*args)

        return out[:n, :self.hid]


def _reference(x, model):
    """Pure-JAX reference mirroring the kernel's compute dtype flow."""
    cd = model.compute_dtype
    hid, d_in = model.hid, model.d_in
    g = model.gamma[0, :hid]
    be = model.beta[0, :hid]
    h = x.astype(cd)
    for l in range(model.num_layers):
        if l == 0:
            w = model.w0[:d_in, :hid]
            b = model.b0[0, :hid]
        else:
            w = model.wr[l - 1, :hid, :hid]
            b = model.br[l - 1, 0, :hid]
        y = jnp.dot(h.astype(cd), w, preferred_element_type=jnp.float32) + b
        mean = jnp.mean(y, axis=-1, keepdims=True)
        c = y - mean
        var = jnp.mean(c * c, axis=-1, keepdims=True)
        y = c * lax.rsqrt(var + LN_EPS) * g + be
        h = jnp.maximum(y, 0.0).astype(cd)
    return h.astype(jnp.float32)


if __name__ == "__main__":
    key = jax.random.PRNGKey(0)
    kx, kparams = jax.random.split(key)

    N, IN_CH, HID = 16, 24, 32
    x = jax.random.normal(kx, (N, IN_CH), jnp.float32)

    # bf16 MXU path (default compute/out dtype) -- tolerance covers bf16 rounding.
    model = PreProcessorPallas(IN_CH, HID, num_layers=2, key=kparams)
    out = jax.block_until_ready(model(x))
    ref = _reference(x, model)
    assert out.shape == (N, HID)
    assert jnp.allclose(out.astype(jnp.float32), ref, atol=2e-2, rtol=2e-2), \
        "bf16 mismatch vs reference"

    # f32 path -- tight tolerance sanity check of the math (incl. var correction).
    model_f32 = PreProcessorPallas(IN_CH, HID, num_layers=2, key=kparams,
                                   compute_dtype=jnp.float32)
    out32 = jax.block_until_ready(model_f32(x))
    ref32 = _reference(x, model_f32)
    assert jnp.allclose(out32, ref32, atol=1e-3, rtol=1e-3), "f32 mismatch vs reference"

    # num_layers == 1 variant: no W[1:]/b[1:] slab is shipped at all.
    model_1 = PreProcessorPallas(IN_CH, HID, num_layers=1, key=kparams,
                                 compute_dtype=jnp.float32)
    out1 = jax.block_until_ready(model_1(x))
    ref1 = _reference(x, model_1)
    assert jnp.allclose(out1, ref1, atol=1e-3, rtol=1e-3), "1-layer mismatch vs reference"

    print("KERNEL_OK")
</pallas_src>

<mosaic_0001>
module attributes {stable_mosaic.version = 11 : i64} {
  func.func @_fused_mlp_kernel(%arg0: i32, %arg1: memref<16x128xbf16, #tpu.memory_space<vmem>>, %arg2: memref<128x128xbf16, #tpu.memory_space<vmem>>, %arg3: memref<1x128xf32, #tpu.memory_space<vmem>>, %arg4: memref<1x128x128xbf16, #tpu.memory_space<vmem>>, %arg5: memref<1x1x128xf32, #tpu.memory_space<vmem>>, %arg6: memref<1x128xf32, #tpu.memory_space<vmem>>, %arg7: memref<1x128xf32, #tpu.memory_space<vmem>>, %arg8: memref<16x128xbf16, #tpu.memory_space<vmem>>) attributes {dimension_semantics = [#tpu.dimension_semantics<parallel>], iteration_bounds = array<i64: 1>, scalar_prefetch = 0 : i64, scratch_operands = 0 : i64, tpu.core_type = #tpu.core_type<tc>, window_params = [{transform_indices = @transform_0, window_bounds = array<i64: 16, 128>}, {pipeline_mode = #tpu.pipeline_mode<synchronous>, transform_indices = @transform_1, window_bounds = array<i64: 128, 128>}, {pipeline_mode = #tpu.pipeline_mode<synchronous>, transform_indices = @transform_2, window_bounds = array<i64: 1, 128>}, {pipeline_mode = #tpu.pipeline_mode<synchronous>, transform_indices = @transform_3, window_bounds = array<i64: 1, 128, 128>}, {pipeline_mode = #tpu.pipeline_mode<synchronous>, transform_indices = @transform_4, window_bounds = array<i64: 1, 1, 128>}, {pipeline_mode = #tpu.pipeline_mode<synchronous>, transform_indices = @transform_5, window_bounds = array<i64: 1, 128>}, {pipeline_mode = #tpu.pipeline_mode<synchronous>, transform_indices = @transform_6, window_bounds = array<i64: 1, 128>}, {transform_indices = @transform_7, window_bounds = array<i64: 16, 128>}]} {
    %c0 = arith.constant 0 : index
    %c0_0 = arith.constant 0 : index
    %0 = vector.load %arg6[%c0, %c0_0] : memref<1x128xf32, #tpu.memory_space<vmem>>, vector<1x128xf32>
    %c0_1 = arith.constant 0 : index
    %c0_2 = arith.constant 0 : index
    %1 = vector.load %arg7[%c0_1, %c0_2] : memref<1x128xf32, #tpu.memory_space<vmem>>, vector<1x128xf32>
    %c0_3 = arith.constant 0 : index
    %c0_4 = arith.constant 0 : index
    %2 = vector.load %arg1[%c0_3, %c0_4] : memref<16x128xbf16, #tpu.memory_space<vmem>>, vector<16x128xbf16>
    %c0_5 = arith.constant 0 : index
    %c0_6 = arith.constant 0 : index
    %3 = vector.load %arg2[%c0_5, %c0_6] : memref<128x128xbf16, #tpu.memory_space<vmem>>, vector<128x128xbf16>
    %cst = arith.constant dense<0.000000e+00> : vector<16x128xf32>
    %4 = tpu.matmul %2, %3, %cst {dimension_numbers = #tpu.dot_dimension_numbers<[1], [0], [0], [1], [0, 0, 1, 1], [], []>} : vector<16x128xbf16>, vector<128x128xbf16>, vector<16x128xf32> -> vector<16x128xf32>
    %c0_7 = arith.constant 0 : index
    %c0_8 = arith.constant 0 : index
    %5 = vector.load %arg3[%c0_7, %c0_8] : memref<1x128xf32, #tpu.memory_space<vmem>>, vector<1x128xf32>
    %6 = vector.broadcast %5 : vector<1x128xf32> to vector<16x128xf32>
    %7 = arith.addf %4, %6 : vector<16x128xf32>
    %cst_9 = arith.constant dense<0.000000e+00> : vector<16xf32>
    %8 = vector.multi_reduction <add>, %7, %cst_9 [1] : vector<16x128xf32> to vector<16xf32>
    %9 = vector.shape_cast %8 : vector<16xf32> to vector<16x1xf32>
    %cst_10 = arith.constant 3.125000e-02 : f32
    %10 = vector.broadcast %cst_10 : f32 to vector<16x1xf32>
    %11 = arith.mulf %9, %10 : vector<16x1xf32>
    %12 = vector.broadcast %11 : vector<16x1xf32> to vector<16x128xf32>
    %13 = arith.subf %7, %12 : vector<16x128xf32>
    %14 = arith.mulf %13, %13 : vector<16x128xf32>
    %cst_11 = arith.constant dense<0.000000e+00> : vector<16xf32>
    %15 = vector.multi_reduction <add>, %14, %cst_11 [1] : vector<16x128xf32> to vector<16xf32>
    %16 = vector.shape_cast %15 : vector<16xf32> to vector<16x1xf32>
    %cst_12 = arith.constant 3.125000e-02 : f32
    %17 = vector.broadcast %cst_12 : f32 to vector<16x1xf32>
    %18 = arith.mulf %16, %17 : vector<16x1xf32>
    %19 = arith.mulf %11, %11 : vector<16x1xf32>
    %cst_13 = arith.constant 3.000000e+00 : f32
    %20 = vector.broadcast %cst_13 : f32 to vector<16x1xf32>
    %21 = arith.mulf %20, %19 : vector<16x1xf32>
    %22 = arith.subf %18, %21 : vector<16x1xf32>
    %cst_14 = arith.constant 9.99999974E-6 : f32
    %23 = vector.broadcast %cst_14 : f32 to vector<16x1xf32>
    %24 = arith.addf %22, %23 : vector<16x1xf32>
    %25 = math.rsqrt %24 : vector<16x1xf32>
    %26 = vector.broadcast %25 : vector<16x1xf32> to vector<16x128xf32>
    %27 = arith.mulf %13, %26 : vector<16x128xf32>
    %28 = vector.broadcast %0 : vector<1x128xf32> to vector<16x128xf32>
    %29 = arith.mulf %27, %28 : vector<16x128xf32>
    %30 = vector.broadcast %1 : vector<1x128xf32> to vector<16x128xf32>
    %31 = arith.addf %29, %30 : vector<16x128xf32>
    %cst_15 = arith.constant 0.000000e+00 : f32
    %32 = vector.broadcast %cst_15 : f32 to vector<16x128xf32>
    %33 = arith.maximumf %31, %32 : vector<16x128xf32>
    %34 = arith.truncf %33 : vector<16x128xf32> to vector<16x128xbf16>
    %c0_16 = arith.constant 0 : index
    %c0_17 = arith.constant 0 : index
    %c0_18 = arith.constant 0 : index
    %35 = vector.load %arg4[%c0_16, %c0_17, %c0_18] : memref<1x128x128xbf16, #tpu.memory_space<vmem>>, vector<1x128x128xbf16>
    %36 = vector.shape_cast %35 : vector<1x128x128xbf16> to vector<128x128xbf16>
    %cst_19 = arith.constant dense<0.000000e+00> : vector<16x128xf32>
    %37 = tpu.matmul %34, %36, %cst_19 {dimension_numbers = #tpu.dot_dimension_numbers<[1], [0], [0], [1], [0, 0, 1, 1], [], []>} : vector<16x128xbf16>, vector<128x128xbf16>, vector<16x128xf32> -> vector<16x128xf32>
    %c0_20 = arith.constant 0 : index
    %c0_21 = arith.constant 0 : index
    %c0_22 = arith.constant 0 : index
    %38 = vector.load %arg5[%c0_20, %c0_21, %c0_22] : memref<1x1x128xf32, #tpu.memory_space<vmem>>, vector<1x1x128xf32>
    %39 = vector.shape_cast %38 : vector<1x1x128xf32> to vector<1x128xf32>
    %40 = vector.broadcast %39 : vector<1x128xf32> to vector<16x128xf32>
    %41 = arith.addf %37, %40 : vector<16x128xf32>
    %cst_23 = arith.constant dense<0.000000e+00> : vector<16xf32>
    %42 = vector.multi_reduction <add>, %41, %cst_23 [1] : vector<16x128xf32> to vector<16xf32>
    %43 = vector.shape_cast %42 : vector<16xf32> to vector<16x1xf32>
    %cst_24 = arith.constant 3.125000e-02 : f32
    %44 = vector.broadcast %cst_24 : f32 to vector<16x1xf32>
    %45 = arith.mulf %43, %44 : vector<16x1xf32>
    %46 = vector.broadcast %45 : vector<16x1xf32> to vector<16x128xf32>
    %47 = arith.subf %41, %46 : vector<16x128xf32>
    %48 = arith.mulf %47, %47 : vector<16x128xf32>
    %cst_25 = arith.constant dense<0.000000e+00> : vector<16xf32>
    %49 = vector.multi_reduction <add>, %48, %cst_25 [1] : vector<16x128xf32> to vector<16xf32>
    %50 = vector.shape_cast %49 : vector<16xf32> to vector<16x1xf32>
    %cst_26 = arith.constant 3.125000e-02 : f32
    %51 = vector.broadcast %cst_26 : f32 to vector<16x1xf32>
    %52 = arith.mulf %50, %51 : vector<16x1xf32>
    %53 = arith.mulf %45, %45 : vector<16x1xf32>
    %cst_27 = arith.constant 3.000000e+00 : f32
    %54 = vector.broadcast %cst_27 : f32 to vector<16x1xf32>
    %55 = arith.mulf %54, %53 : vector<16x1xf32>
    %56 = arith.subf %52, %55 : vector<16x1xf32>
    %cst_28 = arith.constant 9.99999974E-6 : f32
    %57 = vector.broadcast %cst_28 : f32 to vector<16x1xf32>
    %58 = arith.addf %56, %57 : vector<16x1xf32>
    %59 = math.rsqrt %58 : vector<16x1xf32>
    %60 = vector.broadcast %59 : vector<16x1xf32> to vector<16x128xf32>
    %61 = arith.mulf %47, %60 : vector<16x128xf32>
    %62 = vector.broadcast %0 : vector<1x128xf32> to vector<16x128xf32>
    %63 = arith.mulf %61, %62 : vector<16x128xf32>
    %64 = vector.broadcast %1 : vector<1x128xf32> to vector<16x128xf32>
    %65 = arith.addf %63, %64 : vector<16x128xf32>
    %cst_29 = arith.constant 0.000000e+00 : f32
    %66 = vector.broadcast %cst_29 : f32 to vector<16x128xf32>
    %67 = arith.maximumf %65, %66 : vector<16x128xf32>
    %68 = arith.truncf %67 : vector<16x128xf32> to vector<16x128xbf16>
    %c0_30 = arith.constant 0 : index
    %c0_31 = arith.constant 0 : index
    %69 = vector.load %arg8[%c0_30, %c0_31] : memref<16x128xbf16, #tpu.memory_space<vmem>>, vector<16x128xbf16>
    tpu.vector_store %arg8[%c0_30, %c0_31], %68 {strides = array<i32>} : memref<16x128xbf16, #tpu.memory_space<vmem>>, vector<16x128xbf16>,
    return
  }
  func.func @transform_0(%arg0: i32) -> (i32, i32) {
    %c0_i32 = arith.constant 0 : i32
    %c0_i32_0 = arith.constant 0 : i32
    return %arg0, %c0_i32 : i32, i32
  }
  func.func @transform_1(%arg0: i32) -> (i32, i32) {
    %c0_i32 = arith.constant 0 : i32
    %c0_i32_0 = arith.constant 0 : i32
    %c0_i32_1 = arith.constant 0 : i32
    return %c0_i32, %c0_i32_0 : i32, i32
  }
  func.func @transform_2(%arg0: i32) -> (i32, i32) {
    %c0_i32 = arith.constant 0 : i32
    %c0_i32_0 = arith.constant 0 : i32
    %c0_i32_1 = arith.constant 0 : i32
    return %c0_i32, %c0_i32_0 : i32, i32
  }
  func.func @transform_3(%arg0: i32) -> (i32, i32, i32) {
    %c0_i32 = arith.constant 0 : i32
    %c0_i32_0 = arith.constant 0 : i32
    %c0_i32_1 = arith.constant 0 : i32
    %c0_i32_2 = arith.constant 0 : i32
    return %c0_i32, %c0_i32_0, %c0_i32_1 : i32, i32, i32
  }
  func.func @transform_4(%arg0: i32) -> (i32, i32, i32) {
    %c0_i32 = arith.constant 0 : i32
    %c0_i32_0 = arith.constant 0 : i32
    %c0_i32_1 = arith.constant 0 : i32
    %c0_i32_2 = arith.constant 0 : i32
    return %c0_i32, %c0_i32_0, %c0_i32_1 : i32, i32, i32
  }
  func.func @transform_5(%arg0: i32) -> (i32, i32) {
    %c0_i32 = arith.constant 0 : i32
    %c0_i32_0 = arith.constant 0 : i32
    %c0_i32_1 = arith.constant 0 : i32
    return %c0_i32, %c0_i32_0 : i32, i32
  }
  func.func @transform_6(%arg0: i32) -> (i32, i32) {
    %c0_i32 = arith.constant 0 : i32
    %c0_i32_0 = arith.constant 0 : i32
    %c0_i32_1 = arith.constant 0 : i32
    return %c0_i32, %c0_i32_0 : i32, i32
  }
  func.func @transform_7(%arg0: i32) -> (i32, i32) {
    %c0_i32 = arith.constant 0 : i32
    %c0_i32_0 = arith.constant 0 : i32
    return %arg0, %c0_i32 : i32, i32
  }
}

</mosaic_0001>

<llo_original>
// kernel: tpu_custom_call.1
$region0: #{tpu_custom_call.1}
  #allocation0 [shape = 'u32[]', space=smem, size = 0x4, offset = 0x4, fixed_abs, tag = 'smem constant byte address 0x4 - core index']
  #allocation1 [shape = 'u32[144,128]{1,0:T(1,128)}', space=vmem, size = 0x12000, scoped, tag = 'internal scratch']
  %s0 = inlined_call_operand.hbm [shape: bf16[16,128], index: 0, kind: input, shape index: {}]
  %s1 = inlined_call_operand.hbm [shape: bf16[128,128], index: 1, kind: input, shape index: {}]
  %s2 = inlined_call_operand.hbm [shape: f32[1,128], index: 2, kind: input, shape index: {}]
  %s3 = inlined_call_operand.hbm [shape: bf16[1,128,128], index: 3, kind: input, shape index: {}]
  %s4 = inlined_call_operand.hbm [shape: f32[1,1,128], index: 4, kind: input, shape index: {}]
  %s5 = inlined_call_operand.hbm [shape: f32[1,128], index: 5, kind: input, shape index: {}]
  %s6 = inlined_call_operand.hbm [shape: f32[1,128], index: 6, kind: input, shape index: {}]
  %s7 = inlined_call_operand.hbm [shape: bf16[16,128], index: 7, kind: output, shape index: {}]
  %s8 = sld [smem:[#allocation0]]
  $region66: #{tpu_custom_call.1} parent=0
    _
  %s10 = ssub.s32 1, %s8
  %s11 = scalar_select 0, %s10, %s8
  $region1: #{tpu_custom_call.1} parent=0
    #allocation2 [shape = 'u8[4096]{0}', space=vmem, size = 0x1000, scoped, tag = 'input window, operand 0, single buffered']
    #allocation3 [shape = 's32[1]{0}', space=sflag, size = 0x4, scoped, tag = 'scoped memory for tpu_custom_call.1']
    #allocation4 [shape = 's32[1]{0}', space=sflag, size = 0x4, scoped, tag = 'scoped memory for tpu_custom_call.1']
    #allocation5 [shape = 'u8[32768]{0}', space=vmem, size = 0x8000, scoped, tag = 'input window, operand 1, single buffered']
    #allocation6 [shape = 's32[1]{0}', space=sflag, size = 0x4, scoped, tag = 'scoped memory for tpu_custom_call.1']
    #allocation7 [shape = 'u8[512]{0}', space=vmem, size = 0x400, scoped, tag = 'input window, operand 2, single buffered']
    #allocation8 [shape = 'u8[32768]{0}', space=vmem, size = 0x8000, scoped, tag = 'input window, operand 3, single buffered']
    #allocation9 [shape = 's32[1]{0}', space=sflag, size = 0x4, scoped, tag = 'scoped memory for tpu_custom_call.1']
    #allocation10 [shape = 'u8[512]{0}', space=vmem, size = 0x400, scoped, tag = 'input window, operand 4, single buffered']
    #allocation11 [shape = 'u8[512]{0}', space=vmem, size = 0x400, scoped, tag = 'input window, operand 5, single buffered']
    #allocation12 [shape = 's32[1]{0}', space=sflag, size = 0x4, scoped, tag = 'scoped memory for tpu_custom_call.1']
    #allocation13 [shape = 'u8[512]{0}', space=vmem, size = 0x400, scoped, tag = 'input window, operand 6, single buffered']
    #allocation14 [shape = 'u8[4096]{0}', space=vmem, size = 0x1000, scoped, tag = 'output window, operand 0, single buffered']
    %12 = vsyncpa [#allocation3], 0
    %13 = vsyncpa [#allocation6], 0
    %14 = vsyncpa [#allocation9], 0
    %15 = vsyncpa [#allocation12], 0
    %16 = vsyncpa [#allocation4], 0
    // Predicated region
    $region2: #{tpu_custom_call.1} parent=1 // pred_check
      _
    $region3: #{tpu_custom_call.1} parent=1 // pred_check_branch
      %18 = sbr.rel (0) target = $region5
    $region4: #{tpu_custom_call.1} parent=1 // pred_region
      %s20 = ssub.s32 128, 128
      %21 = vsyncadd [#allocation3], %s20
      %s22 = sshll.u32 [#allocation2], 4
      %s23 = int_to_ptr.vmem [resolvable:$true] %s22
      %28 = dma.hbm_to_vmem [thread:$0]  %s0, 128, %s23, [#allocation3], 64, 64, 4
    $region5: #{tpu_custom_call.1} parent=1 // pred_fallthru
      _
    // Predicated region
    $region6: #{tpu_custom_call.1} parent=1 // pred_check
      _
    $region7: #{tpu_custom_call.1} parent=1 // pred_check_branch
      %30 = sbr.rel (0) target = $region9
    $region8: #{tpu_custom_call.1} parent=1 // pred_region
      %s32 = ssub.s32 1024, 1024
      %33 = vsyncadd [#allocation6], %s32
      %s34 = sshll.u32 [#allocation5], 4
      %s35 = int_to_ptr.vmem [resolvable:$true] %s34
      %40 = dma.hbm_to_vmem [thread:$0]  %s1, 1024, %s35, [#allocation6], 64, 64, 4
    $region9: #{tpu_custom_call.1} parent=1 // pred_fallthru
      _
    // Predicated region
    $region10: #{tpu_custom_call.1} parent=1 // pred_check
      _
    $region11: #{tpu_custom_call.1} parent=1 // pred_check_branch
      %42 = sbr.rel (0) target = $region13
    $region12: #{tpu_custom_call.1} parent=1 // pred_region
      %s44 = ssub.s32 16, 16
      %45 = vsyncadd [#allocation6], %s44
      %s47 = sshll.u32 [#allocation7], 4
      %s48 = int_to_ptr.vmem [resolvable:$true] %s47
      %50 = dma.hbm_to_vmem [thread:$0]  %s2, 16, %s48, [#allocation6]
    $region13: #{tpu_custom_call.1} parent=1 // pred_fallthru
      _
    // Predicated region
    $region14: #{tpu_custom_call.1} parent=1 // pred_check
      _
    $region15: #{tpu_custom_call.1} parent=1 // pred_check_branch
      %52 = sbr.rel (0) target = $region17
    $region16: #{tpu_custom_call.1} parent=1 // pred_region
      %s54 = ssub.s32 1024, 1024
      %55 = vsyncadd [#allocation9], %s54
      %s56 = sshll.u32 [#allocation8], 4
      %s57 = int_to_ptr.vmem [resolvable:$true] %s56
      %62 = dma.hbm_to_vmem [thread:$0]  %s3, 1024, %s57, [#allocation9], 64, 64, 4
    $region17: #{tpu_custom_call.1} parent=1 // pred_fallthru
      _
    // Predicated region
    $region18: #{tpu_custom_call.1} parent=1 // pred_check
      _
    $region19: #{tpu_custom_call.1} parent=1 // pred_check_branch
      %64 = sbr.rel (0) target = $region21
    $region20: #{tpu_custom_call.1} parent=1 // pred_region
      %s66 = ssub.s32 16, 16
      %67 = vsyncadd [#allocation9], %s66
      %s69 = sshll.u32 [#allocation10], 4
      %s70 = int_to_ptr.vmem [resolvable:$true] %s69
      %72 = dma.hbm_to_vmem [thread:$0]  %s4, 16, %s70, [#allocation9]
    $region21: #{tpu_custom_call.1} parent=1 // pred_fallthru
      _
    // Predicated region
    $region22: #{tpu_custom_call.1} parent=1 // pred_check
      _
    $region23: #{tpu_custom_call.1} parent=1 // pred_check_branch
      %74 = sbr.rel (0) target = $region25
    $region24: #{tpu_custom_call.1} parent=1 // pred_region
      %s76 = ssub.s32 16, 16
      %77 = vsyncadd [#allocation12], %s76
      %s79 = sshll.u32 [#allocation11], 4
      %s80 = int_to_ptr.vmem [resolvable:$true] %s79
      %82 = dma.hbm_to_vmem [thread:$0]  %s5, 16, %s80, [#allocation12]
    $region25: #{tpu_custom_call.1} parent=1 // pred_fallthru
      _
    // Predicated region
    $region26: #{tpu_custom_call.1} parent=1 // pred_check
      _
    $region27: #{tpu_custom_call.1} parent=1 // pred_check_branch
      %84 = sbr.rel (0) target = $region29
    $region28: #{tpu_custom_call.1} parent=1 // pred_region
      %s86 = ssub.s32 16, 16
      %87 = vsyncadd [#allocation12], %s86
      %s89 = sshll.u32 [#allocation13], 4
      %s90 = int_to_ptr.vmem [resolvable:$true] %s89
      %92 = dma.hbm_to_vmem [thread:$0]  %s6, 16, %s90, [#allocation12]
    $region29: #{tpu_custom_call.1} parent=1 // pred_fallthru
      _
    // Predicated region
    $region30: #{tpu_custom_call.1} parent=1 // pred_check
      _
    $region31: #{tpu_custom_call.1} parent=1 // pred_check_branch
      %94 = sbr.rel (0) target = $region33
    $region32: #{tpu_custom_call.1} parent=1 // pred_region
      %95 = dma.done [#allocation3], 128
    $region33: #{tpu_custom_call.1} parent=1 // pred_fallthru
      _
    // Predicated region
    $region34: #{tpu_custom_call.1} parent=1 // pred_check
      _
    $region35: #{tpu_custom_call.1} parent=1 // pred_check_branch
      %97 = sbr.rel (0) target = $region37
    $region36: #{tpu_custom_call.1} parent=1 // pred_region
      %98 = dma.done [#allocation6], 1024
    $region37: #{tpu_custom_call.1} parent=1 // pred_fallthru
      _
    // Predicated region
    $region38: #{tpu_custom_call.1} parent=1 // pred_check
      _
    $region39: #{tpu_custom_call.1} parent=1 // pred_check_branch
      %100 = sbr.rel (0) target = $region41
    $region40: #{tpu_custom_call.1} parent=1 // pred_region
      %101 = dma.done [#allocation6], 16
    $region41: #{tpu_custom_call.1} parent=1 // pred_fallthru
      _
    // Predicated region
    $region42: #{tpu_custom_call.1} parent=1 // pred_check
      _
    $region43: #{tpu_custom_call.1} parent=1 // pred_check_branch
      %103 = sbr.rel (0) target = $region45
    $region44: #{tpu_custom_call.1} parent=1 // pred_region
      %104 = dma.done [#allocation9], 1024
    $region45: #{tpu_custom_call.1} parent=1 // pred_fallthru
      _
    // Predicated region
    $region46: #{tpu_custom_call.1} parent=1 // pred_check
      _
    $region47: #{tpu_custom_call.1} parent=1 // pred_check_branch
      %106 = sbr.rel (0) target = $region49
    $region48: #{tpu_custom_call.1} parent=1 // pred_region
      %107 = dma.done [#allocation9], 16
    $region49: #{tpu_custom_call.1} parent=1 // pred_fallthru
      _
    // Predicated region
    $region50: #{tpu_custom_call.1} parent=1 // pred_check
      _
    $region51: #{tpu_custom_call.1} parent=1 // pred_check_branch
      %109 = sbr.rel (0) target = $region53
    $region52: #{tpu_custom_call.1} parent=1 // pred_region
      %110 = dma.done [#allocation12], 16
    $region53: #{tpu_custom_call.1} parent=1 // pred_fallthru
      _
    // Predicated region
    $region54: #{tpu_custom_call.1} parent=1 // pred_check
      _
    $region55: #{tpu_custom_call.1} parent=1 // pred_check_branch
      %112 = sbr.rel (0) target = $region57
    $region56: #{tpu_custom_call.1} parent=1 // pred_region
      %113 = dma.done [#allocation12], 16
    $region57: #{tpu_custom_call.1} parent=1 // pred_fallthru
      _
    %v115 = vld [vmem:[#allocation11] sm:$0x1]
    %v116 = vld [vmem:[#allocation13] sm:$0x1]
    %v117 = vld [vmem:[#allocation2] sm:$0xf]
    %v118 = vld [vmem:[#allocation2 + $0x4] sm:$0xf]
    %v119 = vld [vmem:[#allocation5] sm:$0xf]
    %v120 = vld [vmem:[#allocation5 + $0x4] sm:$0xf]
    %v121 = vld [vmem:[#allocation5 + $0x8] sm:$0xf]
    %v122 = vld [vmem:[#allocation5 + $0xc] sm:$0xf]
    %v123 = vld [vmem:[#allocation5 + $0x10] sm:$0xf]
    %v124 = vld [vmem:[#allocation5 + $0x14] sm:$0xf]
    %v125 = vld [vmem:[#allocation5 + $0x18] sm:$0xf]
    %v126 = vld [vmem:[#allocation5 + $0x1c] sm:$0xf]
    %v127 = vld [vmem:[#allocation5 + $0x20] sm:$0xf]
    %v128 = vld [vmem:[#allocation5 + $0x24] sm:$0xf]
    %v129 = vld [vmem:[#allocation5 + $0x28] sm:$0xf]
    %v130 = vld [vmem:[#allocation5 + $0x2c] sm:$0xf]
    %v131 = vld [vmem:[#allocation5 + $0x30] sm:$0xf]
    %v132 = vld [vmem:[#allocation5 + $0x34] sm:$0xf]
    %v133 = vld [vmem:[#allocation5 + $0x38] sm:$0xf]
    %v134 = vld [vmem:[#allocation5 + $0x3c] sm:$0xf]
    %v135 = vld [vmem:[#allocation7] sm:$0x1]
    %v137 = vlaneseq
    %v138 = vshrl.u32 %v137, 7
    %v139 = vsub.s32 0, %v138
    %v140 = vrot.slane %v135, %v139
    %v144 = vunpack.c.l.b16 %v117
    %v145 = vunpack.c.l.b16 %v118
    %v146 = vpack.c.b16 %v145, %v144
    %v164 = vunpack.c.l.b16 %v119
    %v165 = vunpack.c.l.b16 %v120
    %v166 = vunpack.c.l.b16 %v121
    %v167 = vunpack.c.l.b16 %v122
    %v168 = vunpack.c.l.b16 %v123
    %v169 = vunpack.c.l.b16 %v124
    %v170 = vunpack.c.l.b16 %v125
    %v171 = vunpack.c.l.b16 %v126
    %v172 = vunpack.c.l.b16 %v127
    %v173 = vunpack.c.l.b16 %v128
    %v174 = vunpack.c.l.b16 %v129
    %v175 = vunpack.c.l.b16 %v130
    %v176 = vunpack.c.l.b16 %v131
    %v177 = vunpack.c.l.b16 %v132
    %v178 = vunpack.c.l.b16 %v133
    %v179 = vunpack.c.l.b16 %v134
    %v180 = vpack.c.b16 %v165, %v164
    %v181 = vpack.c.b16 %v167, %v166
    %v182 = vpack.c.b16 %v169, %v168
    %v183 = vpack.c.b16 %v171, %v170
    %v184 = vpack.c.b16 %v173, %v172
    %v185 = vpack.c.b16 %v175, %v174
    %v186 = vpack.c.b16 %v177, %v176
    %v187 = vpack.c.b16 %v179, %v178
    %196 = vmatprep.subr.bf16.mxu0 0
    %197 = vmatpush1.bf16.msra.mxu0 %v180
    %198 = vmatprep.subr.bf16.mxu0 0
    %199 = vmatpush1.bf16.msra.mxu0 %v181
    %200 = vmatprep.subr.bf16.mxu0 0
    %201 = vmatpush1.bf16.msra.mxu0 %v182
    %202 = vmatprep.subr.bf16.mxu0 0
    %203 = vmatpush1.bf16.msra.mxu0 %v183
    %204 = vmatprep.subr.bf16.mxu0 0
    %205 = vmatpush1.bf16.msra.mxu0 %v184
    %206 = vmatprep.subr.bf16.mxu0 0
    %207 = vmatpush1.bf16.msra.mxu0 %v185
    %208 = vmatprep.subr.bf16.mxu0 0
    %209 = vmatpush1.bf16.msra.mxu0 %v186
    %210 = vmatprep.subr.bf16.mxu0 0
    %211 = vmatpush1.bf16.msra.mxu0 %v187
    %212 = vmatprep.subr.bf16.mxu0 0
    %213 = vmatpush1.bf16.msra.mxu0 0
    %214 = vmatprep.subr.bf16.mxu0 0
    %215 = vmatpush1.bf16.msra.mxu0 0
    %216 = vmatprep.subr.bf16.mxu0 0
    %217 = vmatpush1.bf16.msra.mxu0 0
    %218 = vmatprep.subr.bf16.mxu0 0
    %219 = vmatpush1.bf16.msra.mxu0 0
    %220 = vmatprep.subr.bf16.mxu0 0
    %221 = vmatpush1.bf16.msra.mxu0 0
    %222 = vmatprep.subr.bf16.mxu0 0
    %223 = vmatpush1.bf16.msra.mxu0 0
    %224 = vmatprep.subr.bf16.mxu0 0
    %225 = vmatpush1.bf16.msra.mxu0 0
    %226 = vmatprep.subr.bf16.mxu0 0
    %227 = vmatpush1.bf16.msra.mxu0 0
    %228 = vmatprep.mubr.bf16.mxu0 0
    %229 = vmatmul.mubr.bf16.gmra.mrb[0].mxu0 %v146
    %v230 = vpop.f32.mrb[0].mxu0
    %v231 = vadd.f32 %v140, %v230
    %v232 = vpop.f32.mrb[0].mxu0
    %v233 = vpop.f32.mrb[0].mxu0
    %v234 = vadd.f32 %v140, %v233
    %v235 = vpop.f32.mrb[0].mxu0
    %236 = vdwg.mxu0
    %237 = vadd.xlane.f32.xlu0 %v231
    %v238 = vpop.xlane.xlu0 %237
    %239 = vadd.xlane.f32.xlu0 %v234
    %v240 = vpop.xlane.xlu0 %239
    %v241 = vmul.f32 %v238, 0.03125
    %v242 = vmul.f32 %v240, 0.03125
    %v243 = vsub.f32 %v231, %v241
    %v244 = vsub.f32 %v234, %v242
    %v245 = vmul.f32 %v243, %v243
    %v246 = vmul.f32 %v244, %v244
    %247 = vadd.xlane.f32.xlu0 %v245
    %v248 = vpop.xlane.xlu0 %247
    %249 = vadd.xlane.f32.xlu0 %v246
    %v250 = vpop.xlane.xlu0 %249
    %v251 = vmul.f32 %v248, 0.03125
    %v252 = vmul.f32 %v250, 0.03125
    %v253 = vmul.f32 %v241, %v241
    %v254 = vmul.f32 %v242, %v242
    %v255 = vmul.f32 %v253, 3.0
    %v256 = vmul.f32 %v254, 3.0
    %v257 = vsub.f32 %v251, %v255
    %v258 = vsub.f32 %v252, %v256
    %v259 = vadd.f32 %v257, 1e-05
    %v260 = vadd.f32 %v258, 1e-05
    %v261 = vrsqrt.pop %v259
    %v262 = vrsqrt.pop %v260
    %v263 = vmul.f32 %v243, %v261
    %v264 = vmul.f32 %v244, %v262
    %v266 = vlaneseq
    %v267 = vshrl.u32 %v266, 7
    %v268 = vsub.s32 0, %v267
    %v269 = vrot.slane %v115, %v268
    %v271 = vmul.f32 %v263, %v269
    %v272 = vmul.f32 %v264, %v269
    %v274 = vlaneseq
    %v275 = vshrl.u32 %v274, 7
    %v276 = vsub.s32 0, %v275
    %v277 = vrot.slane %v116, %v276
    %v279 = vadd.f32 %v271, %v277
    %v280 = vadd.f32 %v272, %v277
    %v281 = vmax.f32 %v279, 0.0
    %v282 = vmax.f32 %v280, 0.0
    %v283 = vpack.c.bf16 %v282, %v281
    %v284 = vld [vmem:[#allocation8] sm:$0xf]
    %v285 = vld [vmem:[#allocation8 + $0x4] sm:$0xf]
    %v286 = vld [vmem:[#allocation8 + $0x8] sm:$0xf]
    %v287 = vld [vmem:[#allocation8 + $0xc] sm:$0xf]
    %v288 = vld [vmem:[#allocation8 + $0x10] sm:$0xf]
    %v289 = vld [vmem:[#allocation8 + $0x14] sm:$0xf]
    %v290 = vld [vmem:[#allocation8 + $0x18] sm:$0xf]
    %v291 = vld [vmem:[#allocation8 + $0x1c] sm:$0xf]
    %v292 = vld [vmem:[#allocation8 + $0x20] sm:$0xf]
    %v293 = vld [vmem:[#allocation8 + $0x24] sm:$0xf]
    %v294 = vld [vmem:[#allocation8 + $0x28] sm:$0xf]
    %v295 = vld [vmem:[#allocation8 + $0x2c] sm:$0xf]
    %v296 = vld [vmem:[#allocation8 + $0x30] sm:$0xf]
    %v297 = vld [vmem:[#allocation8 + $0x34] sm:$0xf]
    %v298 = vld [vmem:[#allocation8 + $0x38] sm:$0xf]
    %v299 = vld [vmem:[#allocation8 + $0x3c] sm:$0xf]
    %v300 = vld [vmem:[#allocation10] sm:$0x1]
    %v302 = vlaneseq
    %v303 = vshrl.u32 %v302, 7
    %v304 = vsub.s32 0, %v303
    %v305 = vrot.slane %v300, %v304
    %v323 = vunpack.c.l.b16 %v284
    %v324 = vunpack.c.l.b16 %v285
    %v325 = vunpack.c.l.b16 %v286
    %v326 = vunpack.c.l.b16 %v287
    %v327 = vunpack.c.l.b16 %v288
    %v328 = vunpack.c.l.b16 %v289
    %v329 = vunpack.c.l.b16 %v290
    %v330 = vunpack.c.l.b16 %v291
    %v331 = vunpack.c.l.b16 %v292
    %v332 = vunpack.c.l.b16 %v293
    %v333 = vunpack.c.l.b16 %v294
    %v334 = vunpack.c.l.b16 %v295
    %v335 = vunpack.c.l.b16 %v296
    %v336 = vunpack.c.l.b16 %v297
    %v337 = vunpack.c.l.b16 %v298
    %v338 = vunpack.c.l.b16 %v299
    %v339 = vpack.c.b16 %v324, %v323
    %v340 = vpack.c.b16 %v326, %v325
    %v341 = vpack.c.b16 %v328, %v327
    %v342 = vpack.c.b16 %v330, %v329
    %v343 = vpack.c.b16 %v332, %v331
    %v344 = vpack.c.b16 %v334, %v333
    %v345 = vpack.c.b16 %v336, %v335
    %v346 = vpack.c.b16 %v338, %v337
    %355 = vmatprep.subr.bf16.mxu0 0
    %356 = vmatpush1.bf16.msra.mxu0 %v339
    %357 = vmatprep.subr.bf16.mxu0 0
    %358 = vmatpush1.bf16.msra.mxu0 %v340
    %359 = vmatprep.subr.bf16.mxu0 0
    %360 = vmatpush1.bf16.msra.mxu0 %v341
    %361 = vmatprep.subr.bf16.mxu0 0
    %362 = vmatpush1.bf16.msra.mxu0 %v342
    %363 = vmatprep.subr.bf16.mxu0 0
    %364 = vmatpush1.bf16.msra.mxu0 %v343
    %365 = vmatprep.subr.bf16.mxu0 0
    %366 = vmatpush1.bf16.msra.mxu0 %v344
    %367 = vmatprep.subr.bf16.mxu0 0
    %368 = vmatpush1.bf16.msra.mxu0 %v345
    %369 = vmatprep.subr.bf16.mxu0 0
    %370 = vmatpush1.bf16.msra.mxu0 %v346
    %371 = vmatprep.subr.bf16.mxu0 0
    %372 = vmatpush1.bf16.msra.mxu0 0
    %373 = vmatprep.subr.bf16.mxu0 0
    %374 = vmatpush1.bf16.msra.mxu0 0
    %375 = vmatprep.subr.bf16.mxu0 0
    %376 = vmatpush1.bf16.msra.mxu0 0
    %377 = vmatprep.subr.bf16.mxu0 0
    %378 = vmatpush1.bf16.msra.mxu0 0
    %379 = vmatprep.subr.bf16.mxu0 0
    %380 = vmatpush1.bf16.msra.mxu0 0
    %381 = vmatprep.subr.bf16.mxu0 0
    %382 = vmatpush1.bf16.msra.mxu0 0
    %383 = vmatprep.subr.bf16.mxu0 0
    %384 = vmatpush1.bf16.msra.mxu0 0
    %385 = vmatprep.subr.bf16.mxu0 0
    %386 = vmatpush1.bf16.msra.mxu0 0
    %387 = vmatprep.mubr.bf16.mxu0 0
    %388 = vmatmul.mubr.bf16.gmra.mrb[0].mxu0 %v283
    %v389 = vpop.f32.mrb[0].mxu0
    %v390 = vadd.f32 %v305, %v389
    %v391 = vpop.f32.mrb[0].mxu0
    %v392 = vpop.f32.mrb[0].mxu0
    %v393 = vadd.f32 %v305, %v392
    %v394 = vpop.f32.mrb[0].mxu0
    %395 = vdwg.mxu0
    %396 = vadd.xlane.f32.xlu0 %v390
    %v397 = vpop.xlane.xlu0 %396
    %398 = vadd.xlane.f32.xlu0 %v393
    %v399 = vpop.xlane.xlu0 %398
    %v400 = vmul.f32 %v397, 0.03125
    %v401 = vmul.f32 %v399, 0.03125
    %v402 = vsub.f32 %v390, %v400
    %v403 = vsub.f32 %v393, %v401
    %v404 = vmul.f32 %v402, %v402
    %v405 = vmul.f32 %v403, %v403
    %406 = vadd.xlane.f32.xlu0 %v404
    %v407 = vpop.xlane.xlu0 %406
    %408 = vadd.xlane.f32.xlu0 %v405
    %v409 = vpop.xlane.xlu0 %408
    %v410 = vmul.f32 %v407, 0.03125
    %v411 = vmul.f32 %v409, 0.03125
    %v412 = vmul.f32 %v400, %v400
    %v413 = vmul.f32 %v401, %v401
    %v414 = vmul.f32 %v412, 3.0
    %v415 = vmul.f32 %v413, 3.0
    %v416 = vsub.f32 %v410, %v414
    %v417 = vsub.f32 %v411, %v415
    %v418 = vadd.f32 %v416, 1e-05
    %v419 = vadd.f32 %v417, 1e-05
    %v420 = vrsqrt.pop %v418
    %v421 = vrsqrt.pop %v419
    %v422 = vmul.f32 %v402, %v420
    %v423 = vmul.f32 %v403, %v421
    %v424 = vmul.f32 %v422, %v269
    %v425 = vmul.f32 %v423, %v269
    %v426 = vadd.f32 %v424, %v277
    %v427 = vadd.f32 %v425, %v277
    %v428 = vmax.f32 %v426, 0.0
    %v429 = vmax.f32 %v427, 0.0
    %v430 = vpack.c.bf16 %v429, %v428
    %v432 = vunpack.c.l.b16 %v430
    %v433 = vunpack.c.h.b16 %v430
    %v434 = vpack.c.b16 %v432, %v432
    %v435 = vpack.c.b16 %v433, %v433
    %438 = vst [vmem:[#allocation14] sm:$0xf] %v434
    %439 = vst [vmem:[#allocation14 + $0x4] sm:$0xf] %v435
    // Predicated region
    $region58: #{tpu_custom_call.1} parent=1 // pred_check
      _
    $region59: #{tpu_custom_call.1} parent=1 // pred_check_branch
      %441 = sbr.rel (0) target = $region61
    $region60: #{tpu_custom_call.1} parent=1 // pred_region
      %s443 = ssub.s32 128, 128
      %444 = vsyncadd [#allocation4], %s443
      %s445 = sshll.u32 [#allocation14], 4
      %s446 = int_to_ptr.vmem [resolvable:$true] %s445
      %451 = dma.vmem_to_hbm [thread:$0]  %s446, 128, %s7, [#allocation4], 64, 64, 4
    $region61: #{tpu_custom_call.1} parent=1 // pred_fallthru
      _
    // Predicated region
    $region62: #{tpu_custom_call.1} parent=1 // pred_check
      _
    $region63: #{tpu_custom_call.1} parent=1 // pred_check_branch
      %453 = sbr.rel (0) target = $region65
    $region64: #{tpu_custom_call.1} parent=1 // pred_region
      %454 = dma.done [#allocation4], 128
    $region65: #{tpu_custom_call.1} parent=1 // pred_fallthru
      _
    %455 = vsyncpa [#allocation3], 1
    %456 = vsyncpa [#allocation6], 1
    %457 = vsyncpa [#allocation9], 1
    %458 = vsyncpa [#allocation12], 1
    %459 = vsyncpa [#allocation4], 1

</llo_original>
